<compile_context>
chip_gen: v5e
topology: v5e:2x2
jax: 0.10.0
libtpu: 0.0.40
codegen_flags: <defaults>
</compile_context>

<pallas_src>
import jax
import jax.numpy as jnp
from jax.experimental import pallas as pl
from jax.experimental.pallas import tpu as pltpu


def _node_vector_head_kernel(tile_lo_ref, tile_hi_ref,
                             idx_ref, forces_ref, vst_ref, w1_ref, w2_ref,
                             out_ref):
    a = pl.program_id(0)   # atom-block index ("parallel")
    e = pl.program_id(1)   # edge-tile index ("arbitrary" reduction, innermost)

    # Zero the resident lane-dense accumulator at the start of each reduction.
    @pl.when(e == 0)
    def _():
        out_ref[...] = jnp.zeros_like(out_ref)

    # Skip edge tiles whose (sorted) edges cannot touch this atom block.
    @pl.when((e >= tile_lo_ref[a]) & (e < tile_hi_ref[a]))
    def _():
        # --- out_mlp: Linear(E,E) on the MXU (bf16 in, f32 acc), SiLU in f32 --
        h = jnp.dot(forces_ref[...], w1_ref[...],
                    preferred_element_type=jnp.float32)          # (TE, emb) f32
        h = jax.nn.silu(h)

        # --- second Linear(E, 1): VPU multiply + XLU row-reduce (off the MXU) -
        s = jnp.sum(h * w2_ref[...], axis=-1, keepdims=True)     # (TE, 1) f32

        # --- scale per-edge unit vectors (V_st zero-padded to 8 lanes) --------
        v = (s * vst_ref[...]).astype(jnp.bfloat16)               # (TE, 8) bf16

        # --- one-hot of (idx - block_start) via lane-iota broadcast -----------
        atom_tile = out_ref.shape[1]
        lane = jax.lax.broadcasted_iota(jnp.int32, (1, atom_tile), 1)
        local_idx = idx_ref[...] - a * atom_tile                  # (TE, 1) int32
        onehot = (local_idx == lane).astype(jnp.bfloat16)         # (TE, AT) bf16

        # --- scatter-sum over idx_t: contract the edge dim on the MXU ---------
        contrib = jax.lax.dot_general(
            v, onehot, (((0,), (0,)), ((), ())),
            preferred_element_type=jnp.float32)                   # (8, AT) f32
        out_ref[...] += contrib


def _round_up(x, m):
    return (x + m - 1) // m * m


def node_vector_output_head(forces, v_st, idx_t, w1, w2, n_atoms, *,
                            edge_tile=1024, atom_tile_max=2048, sort_edges=True):
    """forces: (E, D) f32, v_st: (E, 3) f32, idx_t: (E,) int32, w1: (D, D), w2: (D, 1)."""
    num_edges, emb = forces.shape
    num_targets = w2.shape[1]
    assert num_targets == 1, "h * V_st broadcast only matches torch for num_targets == 1"

    if num_edges == 0 or n_atoms == 0:
        return jnp.zeros((n_atoms, 3), jnp.float32)

    # ---- per-generation VMEM budgets ---------------------------------------
    try:
        vmem_cap = int(pltpu.get_tpu_info().vmem_capacity_bytes)
    except Exception:
        vmem_cap = 64 * 1024 * 1024
    vmem_ceiling = int(0.85 * vmem_cap)
    # bf16 one-hot budget (temporaries accounted below): tighter on 64 MiB parts.
    onehot_budget = (8 * 1024 * 1024 if vmem_cap <= 64 * 1024 * 1024
                     else 24 * 1024 * 1024)

    # ---- atom-block tiling (output lanes) ----------------------------------
    atom_tile = min(_round_up(max(n_atoms, 1), 128), _round_up(atom_tile_max, 128))
    n_atoms_pad = _round_up(max(n_atoms, 1), atom_tile)
    num_atom_blocks = n_atoms_pad // atom_tile

    # ---- edge tiling ---------------------------------------------------------
    # one-hot (bf16) plus compare/broadcast temporaries ~3x its size.
    tile_cap = max(128, (onehot_budget // (atom_tile * 2 * 3)) // 128 * 128)
    edge_tile = max(128, min(_round_up(edge_tile, 128), tile_cap,
                             _round_up(num_edges, 128)))
    num_edges_pad = _round_up(num_edges, edge_tile)
    pad_e = num_edges_pad - num_edges
    num_edge_tiles = num_edges_pad // edge_tile

    # ---- sort edges by target atom and compute per-block edge-tile ranges ----
    idx_i32 = idx_t.astype(jnp.int32)
    forces_s = forces
    vst_s = v_st
    if sort_edges:
        order = jnp.argsort(idx_i32)
        idx_i32 = idx_i32[order]
        forces_s = forces_s[order]
        vst_s = vst_s[order]
        bounds = jnp.arange(num_atom_blocks + 1, dtype=jnp.int32) * atom_tile
        edge_lo = jnp.searchsorted(idx_i32, bounds[:-1], side="left")
        edge_hi = jnp.searchsorted(idx_i32, bounds[1:], side="left")
        tile_lo = (edge_lo // edge_tile).astype(jnp.int32)
        tile_hi = ((edge_hi + edge_tile - 1) // edge_tile).astype(jnp.int32)
    else:
        tile_lo = jnp.zeros((num_atom_blocks,), jnp.int32)
        tile_hi = jnp.full((num_atom_blocks,), num_edge_tiles, jnp.int32)

    # ---- pad + cast inputs ---------------------------------------------------
    # Padded edges: zero forces -> s == 0, zero V_st -> v == 0, so they scatter
    # exactly zero regardless of their (0) index.
    forces_p = jnp.pad(forces_s.astype(jnp.bfloat16), ((0, pad_e), (0, 0)))
    vst_p = jnp.pad(vst_s.astype(jnp.float32),
                    ((0, pad_e), (0, 8 - v_st.shape[1])))
    idx_p = jnp.pad(idx_i32, (0, pad_e)).reshape(num_edges_pad, 1)
    w1_b = w1.astype(jnp.bfloat16)                                   # (emb, emb)
    w2_row = w2.astype(jnp.float32).reshape(emb, num_targets).T      # (1, emb)

    grid = (num_atom_blocks, num_edge_tiles)

    # ---- VMEM estimate (double-buffered tiles + resident weights + temps) ----
    vmem_est = (2 * edge_tile * (emb * 2 + 8 * 4 + 4)     # forces(bf16)+vst(f32)+idx
                + 2 * (emb * emb * 2 + emb * 4)           # W1 (bf16) + W2 row (f32)
                + 3 * edge_tile * atom_tile * 2           # one-hot (bf16) + temps
                + edge_tile * emb * 4                     # h (f32)
                + 2 * 8 * atom_tile * 4)                  # accumulator (f32)
    vmem_limit = int(min(vmem_ceiling, max(16 * 1024 * 1024, 2 * vmem_est)))

    out_pad = pl.pallas_call(
        _node_vector_head_kernel,
        out_shape=jax.ShapeDtypeStruct((8, n_atoms_pad), jnp.float32),
        grid_spec=pltpu.PrefetchScalarGridSpec(
            num_scalar_prefetch=2,            # tile_lo, tile_hi (SMEM)
            grid=grid,
            in_specs=[
                pl.BlockSpec((edge_tile, 1), lambda a, e, lo, hi: (e, 0)),    # idx_t
                pl.BlockSpec((edge_tile, emb), lambda a, e, lo, hi: (e, 0)),  # forces bf16
                pl.BlockSpec((edge_tile, 8), lambda a, e, lo, hi: (e, 0)),    # V_st (padded)
                pl.BlockSpec((emb, emb), lambda a, e, lo, hi: (0, 0)),        # W1 (resident)
                pl.BlockSpec((1, emb), lambda a, e, lo, hi: (0, 0)),          # W2^T (resident)
            ],
            out_specs=pl.BlockSpec((8, atom_tile), lambda a, e, lo, hi: (0, a)),
        ),
        compiler_params=pltpu.CompilerParams(
            dimension_semantics=("parallel", "arbitrary"),
            vmem_limit_bytes=vmem_limit),
    )(tile_lo, tile_hi, idx_p, forces_p, vst_p, w1_b, w2_row)

    # Layout plumbing back to the PyTorch (n_atoms, 3) convention.
    return out_pad[:3, :n_atoms].T.astype(jnp.float32)


def _reference(forces, v_st, idx_t, w1, w2, n_atoms):
    h = jax.nn.silu(forces @ w1)
    s = h @ w2
    v = s * v_st
    return jnp.zeros((n_atoms, 3), jnp.float32).at[idx_t].add(v)


if __name__ == "__main__":
    # Small synthetic config: emb_size_edge=32, num_mlps=2, num_targets=1.
    n_atoms = 16
    num_edges = 64
    emb_size_edge = 32
    num_targets = 1

    key = jax.random.PRNGKey(0)
    k_f, k_v, k_i, k_w1, k_w2 = jax.random.split(key, 5)

    forces = jax.random.normal(k_f, (num_edges, emb_size_edge), jnp.float32)
    v_st = jax.random.normal(k_v, (num_edges, 3), jnp.float32)
    idx_t = jax.random.randint(k_i, (num_edges,), 0, n_atoms, jnp.int32)

    # Deterministic synthetic weights (Dense layers, bias=False as in GemNet Dense).
    w1 = jax.random.normal(k_w1, (emb_size_edge, emb_size_edge), jnp.float32) / jnp.sqrt(
        jnp.float32(emb_size_edge))
    w2 = jax.random.normal(k_w2, (emb_size_edge, num_targets), jnp.float32) / jnp.sqrt(
        jnp.float32(emb_size_edge))

    out = node_vector_output_head(forces, v_st, idx_t, w1, w2, n_atoms)
    out = jax.block_until_ready(out)

    ref = _reference(forces, v_st, idx_t, w1, w2, n_atoms)
    assert out.shape == (n_atoms, 3)
    # Tolerances relaxed because forces/W1 (and v) go through bf16 on the MXU.
    assert jnp.allclose(out, ref, rtol=5e-2, atol=5e-2), (out, ref)

    print("KERNEL_OK")
</pallas_src>

<mosaic_0001>
module attributes {stable_mosaic.version = 11 : i64} {
  func.func @_node_vector_head_kernel(%arg0: i32, %arg1: i32, %arg2: memref<1xi32, #tpu.memory_space<smem>>, %arg3: memref<1xi32, #tpu.memory_space<smem>>, %arg4: memref<128x1xi32, #tpu.memory_space<vmem>>, %arg5: memref<128x32xbf16, #tpu.memory_space<vmem>>, %arg6: memref<128x8xf32, #tpu.memory_space<vmem>>, %arg7: memref<32x32xbf16, #tpu.memory_space<vmem>>, %arg8: memref<1x32xf32, #tpu.memory_space<vmem>>, %arg9: memref<8x128xf32, #tpu.memory_space<vmem>>) attributes {dimension_semantics = [#tpu.dimension_semantics<parallel>, #tpu.dimension_semantics<arbitrary>], iteration_bounds = array<i64: 1, 1>, scalar_prefetch = 2 : i64, scratch_operands = 0 : i64, tpu.core_type = #tpu.core_type<tc>, window_params = [{transform_indices = @transform_0, window_bounds = array<i64: 128, 1>}, {transform_indices = @transform_1, window_bounds = array<i64: 128, 32>}, {transform_indices = @transform_2, window_bounds = array<i64: 128, 8>}, {pipeline_mode = #tpu.pipeline_mode<synchronous>, transform_indices = @transform_3, window_bounds = array<i64: 32, 32>}, {pipeline_mode = #tpu.pipeline_mode<synchronous>, transform_indices = @transform_4, window_bounds = array<i64: 1, 32>}, {transform_indices = @transform_5, window_bounds = array<i64: 8, 128>}]} {
    %c0_i32 = arith.constant 0 : i32
    %0 = arith.cmpi eq, %arg1, %c0_i32 : i32
    %1 = arith.extui %0 : i1 to i32
    %c0_i32_0 = arith.constant 0 : i32
    %2 = arith.cmpi ne, %1, %c0_i32_0 : i32
    scf.if %2 {
      %cst = arith.constant 0.000000e+00 : f32
      %12 = vector.broadcast %cst : f32 to vector<8x128xf32>
      %c0 = arith.constant 0 : index
      %c0_2 = arith.constant 0 : index
      %13 = vector.load %arg9[%c0, %c0_2] : memref<8x128xf32, #tpu.memory_space<vmem>>, vector<8x128xf32>
      tpu.vector_store %arg9[%c0, %c0_2], %12 {strides = array<i32>} : memref<8x128xf32, #tpu.memory_space<vmem>>, vector<8x128xf32>,
    } else {
    }
    %3 = arith.index_cast %arg0 : i32 to index
    %4 = memref.load %arg2[%3] : memref<1xi32, #tpu.memory_space<smem>>
    %5 = arith.cmpi sge, %arg1, %4 : i32
    %6 = arith.index_cast %arg0 : i32 to index
    %7 = memref.load %arg3[%6] : memref<1xi32, #tpu.memory_space<smem>>
    %8 = arith.cmpi slt, %arg1, %7 : i32
    %9 = arith.andi %5, %8 : i1
    %10 = arith.extui %9 : i1 to i32
    %c0_i32_1 = arith.constant 0 : i32
    %11 = arith.cmpi ne, %10, %c0_i32_1 : i32
    scf.if %11 {
      %c0 = arith.constant 0 : index
      %c0_2 = arith.constant 0 : index
      %12 = vector.load %arg5[%c0, %c0_2] : memref<128x32xbf16, #tpu.memory_space<vmem>>, vector<128x32xbf16>
      %c0_3 = arith.constant 0 : index
      %c0_4 = arith.constant 0 : index
      %13 = vector.load %arg7[%c0_3, %c0_4] : memref<32x32xbf16, #tpu.memory_space<vmem>>, vector<32x32xbf16>
      %cst = arith.constant dense<0.000000e+00> : vector<128x32xf32>
      %14 = tpu.matmul %12, %13, %cst {dimension_numbers = #tpu.dot_dimension_numbers<[1], [0], [0], [1], [0, 0, 1, 1], [], []>} : vector<128x32xbf16>, vector<32x32xbf16>, vector<128x32xf32> -> vector<128x32xf32>
      %15 = arith.negf %14 : vector<128x32xf32>
      %16 = math.exp %15 : vector<128x32xf32>
      %cst_5 = arith.constant 1.000000e+00 : f32
      %17 = vector.broadcast %cst_5 : f32 to vector<128x32xf32>
      %18 = arith.addf %17, %16 : vector<128x32xf32>
      %19 = arith.divf %17, %18 : vector<128x32xf32>
      %20 = arith.mulf %14, %19 : vector<128x32xf32>
      %c0_6 = arith.constant 0 : index
      %c0_7 = arith.constant 0 : index
      %21 = vector.load %arg8[%c0_6, %c0_7] : memref<1x32xf32, #tpu.memory_space<vmem>>, vector<1x32xf32>
      %22 = vector.broadcast %21 : vector<1x32xf32> to vector<128x32xf32>
      %23 = arith.mulf %20, %22 : vector<128x32xf32>
      %cst_8 = arith.constant dense<0.000000e+00> : vector<128xf32>
      %24 = vector.multi_reduction <add>, %23, %cst_8 [1] : vector<128x32xf32> to vector<128xf32>
      %25 = vector.shape_cast %24 : vector<128xf32> to vector<128x1xf32>
      %c0_9 = arith.constant 0 : index
      %c0_10 = arith.constant 0 : index
      %26 = vector.load %arg6[%c0_9, %c0_10] : memref<128x8xf32, #tpu.memory_space<vmem>>, vector<128x8xf32>
      %27 = vector.broadcast %25 : vector<128x1xf32> to vector<128x8xf32>
      %28 = arith.mulf %27, %26 : vector<128x8xf32>
      %29 = arith.truncf %28 : vector<128x8xf32> to vector<128x8xbf16>
      %30 = tpu.iota {dimensions = array<i32: 1>} : vector<1x128xi32>
      %c0_11 = arith.constant 0 : index
      %c0_12 = arith.constant 0 : index
      %31 = vector.load %arg4[%c0_11, %c0_12] : memref<128x1xi32, #tpu.memory_space<vmem>>, vector<128x1xi32>
      %c128_i32 = arith.constant 128 : i32
      %32 = arith.muli %arg0, %c128_i32 : i32
      %33 = vector.broadcast %32 : i32 to vector<128x1xi32>
      %34 = arith.subi %31, %33 : vector<128x1xi32>
      %35 = vector.broadcast %34 : vector<128x1xi32> to vector<128x128xi32>
      %36 = vector.broadcast %30 : vector<1x128xi32> to vector<128x128xi32>
      %37 = arith.cmpi eq, %35, %36 : vector<128x128xi32>
      %38 = arith.extui %37 : vector<128x128xi1> to vector<128x128xi32>
      %39 = arith.sitofp %38 : vector<128x128xi32> to vector<128x128xf32>
      %40 = arith.truncf %39 : vector<128x128xf32> to vector<128x128xbf16>
      %cst_13 = arith.constant dense<0.000000e+00> : vector<8x128xf32>
      %41 = tpu.matmul %29, %40, %cst_13 {dimension_numbers = #tpu.dot_dimension_numbers<[0], [0], [1], [1], [0, 1, 1, 1], [], []>} : vector<128x8xbf16>, vector<128x128xbf16>, vector<8x128xf32> -> vector<8x128xf32>
      %c0_14 = arith.constant 0 : index
      %c0_15 = arith.constant 0 : index
      %42 = vector.load %arg9[%c0_14, %c0_15] : memref<8x128xf32, #tpu.memory_space<vmem>>, vector<8x128xf32>
      %43 = arith.addf %42, %41 : vector<8x128xf32>
      %c0_16 = arith.constant 0 : index
      %c0_17 = arith.constant 0 : index
      %44 = vector.load %arg9[%c0_16, %c0_17] : memref<8x128xf32, #tpu.memory_space<vmem>>, vector<8x128xf32>
      tpu.vector_store %arg9[%c0_16, %c0_17], %43 {strides = array<i32>} : memref<8x128xf32, #tpu.memory_space<vmem>>, vector<8x128xf32>,
    } else {
    }
    return
  }
  func.func @transform_0(%arg0: i32, %arg1: i32, %arg2: memref<1xi32, #tpu.memory_space<smem>>, %arg3: memref<1xi32, #tpu.memory_space<smem>>) -> (i32, i32) {
    %c0_i32 = arith.constant 0 : i32
    %c0_i32_0 = arith.constant 0 : i32
    return %arg1, %c0_i32 : i32, i32
  }
  func.func @transform_1(%arg0: i32, %arg1: i32, %arg2: memref<1xi32, #tpu.memory_space<smem>>, %arg3: memref<1xi32, #tpu.memory_space<smem>>) -> (i32, i32) {
    %c0_i32 = arith.constant 0 : i32
    %c0_i32_0 = arith.constant 0 : i32
    return %arg1, %c0_i32 : i32, i32
  }
  func.func @transform_2(%arg0: i32, %arg1: i32, %arg2: memref<1xi32, #tpu.memory_space<smem>>, %arg3: memref<1xi32, #tpu.memory_space<smem>>) -> (i32, i32) {
    %c0_i32 = arith.constant 0 : i32
    %c0_i32_0 = arith.constant 0 : i32
    return %arg1, %c0_i32 : i32, i32
  }
  func.func @transform_3(%arg0: i32, %arg1: i32, %arg2: memref<1xi32, #tpu.memory_space<smem>>, %arg3: memref<1xi32, #tpu.memory_space<smem>>) -> (i32, i32) {
    %c0_i32 = arith.constant 0 : i32
    %c0_i32_0 = arith.constant 0 : i32
    %c0_i32_1 = arith.constant 0 : i32
    return %c0_i32, %c0_i32_0 : i32, i32
  }
  func.func @transform_4(%arg0: i32, %arg1: i32, %arg2: memref<1xi32, #tpu.memory_space<smem>>, %arg3: memref<1xi32, #tpu.memory_space<smem>>) -> (i32, i32) {
    %c0_i32 = arith.constant 0 : i32
    %c0_i32_0 = arith.constant 0 : i32
    %c0_i32_1 = arith.constant 0 : i32
    return %c0_i32, %c0_i32_0 : i32, i32
  }
  func.func @transform_5(%arg0: i32, %arg1: i32, %arg2: memref<1xi32, #tpu.memory_space<smem>>, %arg3: memref<1xi32, #tpu.memory_space<smem>>) -> (i32, i32) {
    %c0_i32 = arith.constant 0 : i32
    %c0_i32_0 = arith.constant 0 : i32
    return %c0_i32, %arg0 : i32, i32
  }
}

</mosaic_0001>

<llo_original>
// kernel: tpu_custom_call.1
$region0: #{tpu_custom_call.1}
  #allocation0 [shape = 'u32[]', space=smem, size = 0x4, offset = 0x4, fixed_abs, tag = 'smem constant byte address 0x4 - core index']
  #allocation1 [shape = 'u32[72,128]{1,0:T(1,128)}', space=vmem, size = 0x9000, scoped, tag = 'internal scratch']
  #allocation2 [shape = 's32[1]{0}', space=sflag, size = 0x4, scoped, tag = 'scoped memory for tpu_custom_call.1']
  #allocation3 [shape = 's32[1]{0:T(128)S(6)}', space=smem, size = 0x200, scoped, tag = 'prefetched SMEM operand 0']
  #allocation4 [shape = 's32[1]{0:T(128)S(6)}', space=smem, size = 0x200, scoped, tag = 'prefetched SMEM operand 1']
  %s0 = inlined_call_operand.<no memory space> [shape: s32[1], index: 0, kind: input, shape index: {}]
  %s1 = inlined_call_operand.<no memory space> [shape: s32[1], index: 1, kind: input, shape index: {}]
  %s2 = inlined_call_operand.vmem [shape: s32[128,1], index: 2, kind: input, shape index: {}]
  %s3 = inlined_call_operand.vmem [shape: bf16[128,32], index: 3, kind: input, shape index: {}]
  %s4 = inlined_call_operand.vmem [shape: f32[128,8], index: 4, kind: input, shape index: {}]
  %s5 = inlined_call_operand.vmem [shape: bf16[32,32], index: 5, kind: input, shape index: {}]
  %s6 = inlined_call_operand.vmem [shape: f32[1,32], index: 6, kind: input, shape index: {}]
  %s7 = inlined_call_operand.hbm [shape: f32[8,128], index: 7, kind: output, shape index: {}]
  %s8 = sld [smem:[#allocation0]]
  $region38: #{tpu_custom_call.1} parent=0
    _
  %s10 = ssub.s32 1, %s8
  %s11 = scalar_select 0, %s10, %s8
  %12 = sst [smem:[#allocation3]] %s0
  %13 = sst [smem:[#allocation4]] %s1
  $region1: #{tpu_custom_call.1} parent=0
    #allocation5 [shape = 'u8[4096]{0}', space=vmem, size = 0x1000, scoped, tag = 'output window, operand 0, single buffered']
    #allocation6 [shape = 's32[1]{0}', space=sflag, size = 0x4, scoped, tag = 'scoped memory for tpu_custom_call.1']
    %14 = vsyncpa [#allocation6], 0
    // Predicated region
    $region2: #{tpu_custom_call.1} parent=1 // pred_check
      _
    $region3: #{tpu_custom_call.1} parent=1 // pred_check_branch
      %16 = sbr.rel (0) target = $region5
    $region4: #{tpu_custom_call.1} parent=1 // pred_region
      _
    $region5: #{tpu_custom_call.1} parent=1 // pred_fallthru
      _
    // Predicated region
    $region6: #{tpu_custom_call.1} parent=1 // pred_check
      _
    $region7: #{tpu_custom_call.1} parent=1 // pred_check_branch
      %18 = sbr.rel (0) target = $region9
    $region8: #{tpu_custom_call.1} parent=1 // pred_region
      _
    $region9: #{tpu_custom_call.1} parent=1 // pred_fallthru
      _
    // Predicated region
    $region10: #{tpu_custom_call.1} parent=1 // pred_check
      _
    $region11: #{tpu_custom_call.1} parent=1 // pred_check_branch
      %20 = sbr.rel (0) target = $region13
    $region12: #{tpu_custom_call.1} parent=1 // pred_region
      _
    $region13: #{tpu_custom_call.1} parent=1 // pred_fallthru
      _
    // Predicated region
    $region14: #{tpu_custom_call.1} parent=1 // pred_check
      _
    $region15: #{tpu_custom_call.1} parent=1 // pred_check_branch
      %22 = sbr.rel (0) target = $region17
    $region16: #{tpu_custom_call.1} parent=1 // pred_region
      _
    $region17: #{tpu_custom_call.1} parent=1 // pred_fallthru
      _
    // Predicated region
    $region18: #{tpu_custom_call.1} parent=1 // pred_check
      _
    $region19: #{tpu_custom_call.1} parent=1 // pred_check_branch
      %24 = sbr.rel (0) target = $region21
    $region20: #{tpu_custom_call.1} parent=1 // pred_region
      _
    $region21: #{tpu_custom_call.1} parent=1 // pred_fallthru
      _
    %p26 = scmp.eq.s32.totalorder 0, 0
    // Predicated region
    $region22: #{tpu_custom_call.1} parent=1 // pred_check
      %p27 = pneg %p26
    $region23: #{tpu_custom_call.1} parent=1 // pred_check_branch
      %29 = sbr.rel (%p27) target = $region25
    $region24: #{tpu_custom_call.1} parent=1 // pred_region
      %30 = vst [vmem:[#allocation5] sm:$0xff] 0.0
    $region25: #{tpu_custom_call.1} parent=1 // pred_fallthru
      _
    %s31 = sld [smem:[#allocation3]]
    %p32 = scmp.ge.s32.totalorder 0, %s31
    %s33 = sld [smem:[#allocation4]]
    %p34 = scmp.lt.s32.totalorder 0, %s33
    %p35 = pnand %p32, %p34
    %p36 = pneg %p35
    // Predicated region
    $region26: #{tpu_custom_call.1} parent=1 // pred_check
      _
    $region27: #{tpu_custom_call.1} parent=1 // pred_check_branch
      %38 = sbr.rel (%p35) target = $region29
    $region28: #{tpu_custom_call.1} parent=1 // pred_region
      %v39 = vld [vmem:[%s3] sm:$0xf]
      %v40 = vld [vmem:[%s3 + $0x4] sm:$0xf]
      %v41 = vld [vmem:[%s3 + $0x8] sm:$0xf]
      %v42 = vld [vmem:[%s3 + $0xc] sm:$0xf]
      %v43 = vld [vmem:[%s3 + $0x10] sm:$0xf]
      %v44 = vld [vmem:[%s3 + $0x14] sm:$0xf]
      %v45 = vld [vmem:[%s3 + $0x18] sm:$0xf]
      %v46 = vld [vmem:[%s3 + $0x1c] sm:$0xf]
      %v47 = vld [vmem:[%s3 + $0x20] sm:$0xf]
      %v48 = vld [vmem:[%s3 + $0x24] sm:$0xf]
      %v49 = vld [vmem:[%s3 + $0x28] sm:$0xf]
      %v50 = vld [vmem:[%s3 + $0x2c] sm:$0xf]
      %v51 = vld [vmem:[%s3 + $0x30] sm:$0xf]
      %v52 = vld [vmem:[%s3 + $0x34] sm:$0xf]
      %v53 = vld [vmem:[%s3 + $0x38] sm:$0xf]
      %v54 = vld [vmem:[%s3 + $0x3c] sm:$0xf]
      %v55 = vld [vmem:[%s5] sm:$0xf]
      %v56 = vld [vmem:[%s5 + $0x4] sm:$0xf]
      %v57 = vld [vmem:[%s5 + $0x8] sm:$0xf]
      %v58 = vld [vmem:[%s5 + $0xc] sm:$0xf]
      %v75 = vunpack.c.l.b16 %v39
      %v76 = vunpack.c.l.b16 %v40
      %v77 = vunpack.c.l.b16 %v41
      %v78 = vunpack.c.l.b16 %v42
      %v79 = vunpack.c.l.b16 %v43
      %v80 = vunpack.c.l.b16 %v44
      %v81 = vunpack.c.l.b16 %v45
      %v82 = vunpack.c.l.b16 %v46
      %v83 = vunpack.c.l.b16 %v47
      %v84 = vunpack.c.l.b16 %v48
      %v85 = vunpack.c.l.b16 %v49
      %v86 = vunpack.c.l.b16 %v50
      %v87 = vunpack.c.l.b16 %v51
      %v88 = vunpack.c.l.b16 %v52
      %v89 = vunpack.c.l.b16 %v53
      %v90 = vunpack.c.l.b16 %v54
      %v91 = vpack.c.b16 %v76, %v75
      %v92 = vpack.c.b16 %v78, %v77
      %v93 = vpack.c.b16 %v80, %v79
      %v94 = vpack.c.b16 %v82, %v81
      %v95 = vpack.c.b16 %v84, %v83
      %v96 = vpack.c.b16 %v86, %v85
      %v97 = vpack.c.b16 %v88, %v87
      %v98 = vpack.c.b16 %v90, %v89
      %v103 = vunpack.c.l.b16 %v55
      %v104 = vunpack.c.l.b16 %v56
      %v105 = vunpack.c.l.b16 %v57
      %v106 = vunpack.c.l.b16 %v58
      %v107 = vpack.c.b16 %v104, %v103
      %v108 = vpack.c.b16 %v106, %v105
      %vm111 = vcmask 261120
      %v113 = vsel %vm111, %v91, 0
      %v116 = vsel %vm111, %v92, 0
      %v119 = vsel %vm111, %v93, 0
      %v122 = vsel %vm111, %v94, 0
      %v125 = vsel %vm111, %v95, 0
      %v128 = vsel %vm111, %v96, 0
      %v131 = vsel %vm111, %v97, 0
      %v134 = vsel %vm111, %v98, 0
      %136 = vmatpush.bf16.msra.mxu0 0
      %137 = vmatpush.bf16.msra.mxu0 0
      %138 = vmatpush.bf16.msra.mxu0 0
      %139 = vmatpush.bf16.msra.mxu0 0
      %140 = vmatpush.bf16.msra.mxu0 0
      %141 = vmatpush.bf16.msra.mxu0 0
      %142 = vmatpush.bf16.msra.mxu0 %v108
      %143 = vmatpush.bf16.msra.mxu0 %v107
      %144 = vmatmul.bf16.gmra.mxu0 %v113
      %v145 = vpop.f32.mrf.mxu0
      %v146 = vadd.f32 0.0, %v145
      %v147 = vpop.f32.mrf.mxu0
      %v148 = vadd.f32 0.0, %v147
      %149 = vmatmul.bf16.gmra.mxu0 %v116
      %v150 = vpop.f32.mrf.mxu0
      %v151 = vadd.f32 0.0, %v150
      %v152 = vpop.f32.mrf.mxu0
      %v153 = vadd.f32 0.0, %v152
      %154 = vmatmul.bf16.gmra.mxu0 %v119
      %v155 = vpop.f32.mrf.mxu0
      %v156 = vadd.f32 0.0, %v155
      %v157 = vpop.f32.mrf.mxu0
      %v158 = vadd.f32 0.0, %v157
      %159 = vmatmul.bf16.gmra.mxu0 %v122
      %v160 = vpop.f32.mrf.mxu0
      %v161 = vadd.f32 0.0, %v160
      %v162 = vpop.f32.mrf.mxu0
      %v163 = vadd.f32 0.0, %v162
      %164 = vmatmul.bf16.gmra.mxu0 %v125
      %v165 = vpop.f32.mrf.mxu0
      %v166 = vadd.f32 0.0, %v165
      %v167 = vpop.f32.mrf.mxu0
      %v168 = vadd.f32 0.0, %v167
      %169 = vmatmul.bf16.gmra.mxu0 %v128
      %v170 = vpop.f32.mrf.mxu0
      %v171 = vadd.f32 0.0, %v170
      %v172 = vpop.f32.mrf.mxu0
      %v173 = vadd.f32 0.0, %v172
      %174 = vmatmul.bf16.gmra.mxu0 %v131
      %v175 = vpop.f32.mrf.mxu0
      %v176 = vadd.f32 0.0, %v175
      %v177 = vpop.f32.mrf.mxu0
      %v178 = vadd.f32 0.0, %v177
      %179 = vmatmul.bf16.gmra.mxu0 %v134
      %v180 = vpop.f32.mrf.mxu0
      %v181 = vadd.f32 0.0, %v180
      %v182 = vpop.f32.mrf.mxu0
      %v183 = vadd.f32 0.0, %v182
      %184 = vdwg.mxu0
      %v185 = vxor.u32 %v146, 2147483648
      %v186 = vxor.u32 %v148, 2147483648
      %v187 = vxor.u32 %v151, 2147483648
      %v188 = vxor.u32 %v153, 2147483648
      %v189 = vxor.u32 %v156, 2147483648
      %v190 = vxor.u32 %v158, 2147483648
      %v191 = vxor.u32 %v161, 2147483648
      %v192 = vxor.u32 %v163, 2147483648
      %v193 = vxor.u32 %v166, 2147483648
      %v194 = vxor.u32 %v168, 2147483648
      %v195 = vxor.u32 %v171, 2147483648
      %v196 = vxor.u32 %v173, 2147483648
      %v197 = vxor.u32 %v176, 2147483648
      %v198 = vxor.u32 %v178, 2147483648
      %v199 = vxor.u32 %v181, 2147483648
      %v200 = vxor.u32 %v183, 2147483648
      %v201 = vmul.f32 %v185, 1.442695
      %v202 = vpow.pop %v201
      %v203 = vmul.f32 %v186, 1.442695
      %v204 = vpow.pop %v203
      %v205 = vmul.f32 %v187, 1.442695
      %v206 = vpow.pop %v205
      %v207 = vmul.f32 %v188, 1.442695
      %v208 = vpow.pop %v207
      %v209 = vmul.f32 %v189, 1.442695
      %v210 = vpow.pop %v209
      %v211 = vmul.f32 %v190, 1.442695
      %v212 = vpow.pop %v211
      %v213 = vmul.f32 %v191, 1.442695
      %v214 = vpow.pop %v213
      %v215 = vmul.f32 %v192, 1.442695
      %v216 = vpow.pop %v215
      %v217 = vmul.f32 %v193, 1.442695
      %v218 = vpow.pop %v217
      %v219 = vmul.f32 %v194, 1.442695
      %v220 = vpow.pop %v219
      %v221 = vmul.f32 %v195, 1.442695
      %v222 = vpow.pop %v221
      %v223 = vmul.f32 %v196, 1.442695
      %v224 = vpow.pop %v223
      %v225 = vmul.f32 %v197, 1.442695
      %v226 = vpow.pop %v225
      %v227 = vmul.f32 %v198, 1.442695
      %v228 = vpow.pop %v227
      %v229 = vmul.f32 %v199, 1.442695
      %v230 = vpow.pop %v229
      %v231 = vmul.f32 %v200, 1.442695
      %v232 = vpow.pop %v231
      %v233 = vadd.f32 %v202, 1.0
      %v234 = vadd.f32 %v204, 1.0
      %v235 = vadd.f32 %v206, 1.0
      %v236 = vadd.f32 %v208, 1.0
      %v237 = vadd.f32 %v210, 1.0
      %v238 = vadd.f32 %v212, 1.0
      %v239 = vadd.f32 %v214, 1.0
      %v240 = vadd.f32 %v216, 1.0
      %v241 = vadd.f32 %v218, 1.0
      %v242 = vadd.f32 %v220, 1.0
      %v243 = vadd.f32 %v222, 1.0
      %v244 = vadd.f32 %v224, 1.0
      %v245 = vadd.f32 %v226, 1.0
      %v246 = vadd.f32 %v228, 1.0
      %v247 = vadd.f32 %v230, 1.0
      %v248 = vadd.f32 %v232, 1.0
      %v249 = vrcp.pop %v233
      %v250 = vmul.f32 %v233, %v249
      %v251 = vsub.f32 1.0, %v250
      %v252 = vmul.f32 %v249, %v251
      %v253 = vadd.f32 %v249, %v252
      %vm254 = vweird.f32 %v233
      %vm255 = vweird.f32 %v249
      %vm256 = vmor %vm254, %vm255
      %v257 = vsel %vm256, %v249, %v253
      %v258 = vand.u32 2147483647, %v233
      %vm259 = vcmp.eq.f32.partialorder %v258, 8.507059e+37
      %v260 = vand.u32 %v233, 2147483648
      %v261 = vor.u32 1.1754944e-38, %v260
      %v262 = vsel %vm259, %v261, %v257
      %v263 = vmul.f32 1.0, %v262
      %v264 = vrcp.pop %v234
      %v265 = vmul.f32 %v234, %v264
      %v266 = vsub.f32 1.0, %v265
      %v267 = vmul.f32 %v264, %v266
      %v268 = vadd.f32 %v264, %v267
      %vm269 = vweird.f32 %v234
      %vm270 = vweird.f32 %v264
      %vm271 = vmor %vm269, %vm270
      %v272 = vsel %vm271, %v264, %v268
      %v273 = vand.u32 2147483647, %v234
      %vm274 = vcmp.eq.f32.partialorder %v273, 8.507059e+37
      %v275 = vand.u32 %v234, 2147483648
      %v276 = vor.u32 1.1754944e-38, %v275
      %v277 = vsel %vm274, %v276, %v272
      %v278 = vmul.f32 1.0, %v277
      %v279 = vrcp.pop %v235
      %v280 = vmul.f32 %v235, %v279
      %v281 = vsub.f32 1.0, %v280
      %v282 = vmul.f32 %v279, %v281
      %v283 = vadd.f32 %v279, %v282
      %vm284 = vweird.f32 %v235
      %vm285 = vweird.f32 %v279
      %vm286 = vmor %vm284, %vm285
      %v287 = vsel %vm286, %v279, %v283
      %v288 = vand.u32 2147483647, %v235
      %vm289 = vcmp.eq.f32.partialorder %v288, 8.507059e+37
      %v290 = vand.u32 %v235, 2147483648
      %v291 = vor.u32 1.1754944e-38, %v290
      %v292 = vsel %vm289, %v291, %v287
      %v293 = vmul.f32 1.0, %v292
      %v294 = vrcp.pop %v236
      %v295 = vmul.f32 %v236, %v294
      %v296 = vsub.f32 1.0, %v295
      %v297 = vmul.f32 %v294, %v296
      %v298 = vadd.f32 %v294, %v297
      %vm299 = vweird.f32 %v236
      %vm300 = vweird.f32 %v294
      %vm301 = vmor %vm299, %vm300
      %v302 = vsel %vm301, %v294, %v298
      %v303 = vand.u32 2147483647, %v236
      %vm304 = vcmp.eq.f32.partialorder %v303, 8.507059e+37
      %v305 = vand.u32 %v236, 2147483648
      %v306 = vor.u32 1.1754944e-38, %v305
      %v307 = vsel %vm304, %v306, %v302
      %v308 = vmul.f32 1.0, %v307
      %v309 = vrcp.pop %v237
      %v310 = vmul.f32 %v237, %v309
      %v311 = vsub.f32 1.0, %v310
      %v312 = vmul.f32 %v309, %v311
      %v313 = vadd.f32 %v309, %v312
      %vm314 = vweird.f32 %v237
      %vm315 = vweird.f32 %v309
      %vm316 = vmor %vm314, %vm315
      %v317 = vsel %vm316, %v309, %v313
      %v318 = vand.u32 2147483647, %v237
      %vm319 = vcmp.eq.f32.partialorder %v318, 8.507059e+37
      %v320 = vand.u32 %v237, 2147483648
      %v321 = vor.u32 1.1754944e-38, %v320
      %v322 = vsel %vm319, %v321, %v317
      %v323 = vmul.f32 1.0, %v322
      %v324 = vrcp.pop %v238
      %v325 = vmul.f32 %v238, %v324
      %v326 = vsub.f32 1.0, %v325
      %v327 = vmul.f32 %v324, %v326
      %v328 = vadd.f32 %v324, %v327
      %vm329 = vweird.f32 %v238
      %vm330 = vweird.f32 %v324
      %vm331 = vmor %vm329, %vm330
      %v332 = vsel %vm331, %v324, %v328
      %v333 = vand.u32 2147483647, %v238
      %vm334 = vcmp.eq.f32.partialorder %v333, 8.507059e+37
      %v335 = vand.u32 %v238, 2147483648
      %v336 = vor.u32 1.1754944e-38, %v335
      %v337 = vsel %vm334, %v336, %v332
      %v338 = vmul.f32 1.0, %v337
      %v339 = vrcp.pop %v239
      %v340 = vmul.f32 %v239, %v339
      %v341 = vsub.f32 1.0, %v340
      %v342 = vmul.f32 %v339, %v341
      %v343 = vadd.f32 %v339, %v342
      %vm344 = vweird.f32 %v239
      %vm345 = vweird.f32 %v339
      %vm346 = vmor %vm344, %vm345
      %v347 = vsel %vm346, %v339, %v343
      %v348 = vand.u32 2147483647, %v239
      %vm349 = vcmp.eq.f32.partialorder %v348, 8.507059e+37
      %v350 = vand.u32 %v239, 2147483648
      %v351 = vor.u32 1.1754944e-38, %v350
      %v352 = vsel %vm349, %v351, %v347
      %v353 = vmul.f32 1.0, %v352
      %v354 = vrcp.pop %v240
      %v355 = vmul.f32 %v240, %v354
      %v356 = vsub.f32 1.0, %v355
      %v357 = vmul.f32 %v354, %v356
      %v358 = vadd.f32 %v354, %v357
      %vm359 = vweird.f32 %v240
      %vm360 = vweird.f32 %v354
      %vm361 = vmor %vm359, %vm360
      %v362 = vsel %vm361, %v354, %v358
      %v363 = vand.u32 2147483647, %v240
      %vm364 = vcmp.eq.f32.partialorder %v363, 8.507059e+37
      %v365 = vand.u32 %v240, 2147483648
      %v366 = vor.u32 1.1754944e-38, %v365
      %v367 = vsel %vm364, %v366, %v362
      %v368 = vmul.f32 1.0, %v367
      %v369 = vrcp.pop %v241
      %v370 = vmul.f32 %v241, %v369
      %v371 = vsub.f32 1.0, %v370
      %v372 = vmul.f32 %v369, %v371
      %v373 = vadd.f32 %v369, %v372
      %vm374 = vweird.f32 %v241
      %vm375 = vweird.f32 %v369
      %vm376 = vmor %vm374, %vm375
      %v377 = vsel %vm376, %v369, %v373
      %v378 = vand.u32 2147483647, %v241
      %vm379 = vcmp.eq.f32.partialorder %v378, 8.507059e+37
      %v380 = vand.u32 %v241, 2147483648
      %v381 = vor.u32 1.1754944e-38, %v380
      %v382 = vsel %vm379, %v381, %v377
      %v383 = vmul.f32 1.0, %v382
      %v384 = vrcp.pop %v242
      %v385 = vmul.f32 %v242, %v384
      %v386 = vsub.f32 1.0, %v385
      %v387 = vmul.f32 %v384, %v386
      %v388 = vadd.f32 %v384, %v387
      %vm389 = vweird.f32 %v242
      %vm390 = vweird.f32 %v384
      %vm391 = vmor %vm389, %vm390
      %v392 = vsel %vm391, %v384, %v388
      %v393 = vand.u32 2147483647, %v242
      %vm394 = vcmp.eq.f32.partialorder %v393, 8.507059e+37
      %v395 = vand.u32 %v242, 2147483648
      %v396 = vor.u32 1.1754944e-38, %v395
      %v397 = vsel %vm394, %v396, %v392
      %v398 = vmul.f32 1.0, %v397
      %v399 = vrcp.pop %v243
      %v400 = vmul.f32 %v243, %v399
      %v401 = vsub.f32 1.0, %v400
      %v402 = vmul.f32 %v399, %v401
      %v403 = vadd.f32 %v399, %v402
      %vm404 = vweird.f32 %v243
      %vm405 = vweird.f32 %v399
      %vm406 = vmor %vm404, %vm405
      %v407 = vsel %vm406, %v399, %v403
      %v408 = vand.u32 2147483647, %v243
      %vm409 = vcmp.eq.f32.partialorder %v408, 8.507059e+37
      %v410 = vand.u32 %v243, 2147483648
      %v411 = vor.u32 1.1754944e-38, %v410
      %v412 = vsel %vm409, %v411, %v407
      %v413 = vmul.f32 1.0, %v412
      %v414 = vrcp.pop %v244
      %v415 = vmul.f32 %v244, %v414
      %v416 = vsub.f32 1.0, %v415
      %v417 = vmul.f32 %v414, %v416
      %v418 = vadd.f32 %v414, %v417
      %vm419 = vweird.f32 %v244
      %vm420 = vweird.f32 %v414
      %vm421 = vmor %vm419, %vm420
      %v422 = vsel %vm421, %v414, %v418
      %v423 = vand.u32 2147483647, %v244
      %vm424 = vcmp.eq.f32.partialorder %v423, 8.507059e+37
      %v425 = vand.u32 %v244, 2147483648
      %v426 = vor.u32 1.1754944e-38, %v425
      %v427 = vsel %vm424, %v426, %v422
      %v428 = vmul.f32 1.0, %v427
      %v429 = vrcp.pop %v245
      %v430 = vmul.f32 %v245, %v429
      %v431 = vsub.f32 1.0, %v430
      %v432 = vmul.f32 %v429, %v431
      %v433 = vadd.f32 %v429, %v432
      %vm434 = vweird.f32 %v245
      %vm435 = vweird.f32 %v429
      %vm436 = vmor %vm434, %vm435
      %v437 = vsel %vm436, %v429, %v433
      %v438 = vand.u32 2147483647, %v245
      %vm439 = vcmp.eq.f32.partialorder %v438, 8.507059e+37
      %v440 = vand.u32 %v245, 2147483648
      %v441 = vor.u32 1.1754944e-38, %v440
      %v442 = vsel %vm439, %v441, %v437
      %v443 = vmul.f32 1.0, %v442
      %v444 = vrcp.pop %v246
      %v445 = vmul.f32 %v246, %v444
      %v446 = vsub.f32 1.0, %v445
      %v447 = vmul.f32 %v444, %v446
      %v448 = vadd.f32 %v444, %v447
      %vm449 = vweird.f32 %v246
      %vm450 = vweird.f32 %v444
      %vm451 = vmor %vm449, %vm450
      %v452 = vsel %vm451, %v444, %v448
      %v453 = vand.u32 2147483647, %v246
      %vm454 = vcmp.eq.f32.partialorder %v453, 8.507059e+37
      %v455 = vand.u32 %v246, 2147483648
      %v456 = vor.u32 1.1754944e-38, %v455
      %v457 = vsel %vm454, %v456, %v452
      %v458 = vmul.f32 1.0, %v457
      %v459 = vrcp.pop %v247
      %v460 = vmul.f32 %v247, %v459
      %v461 = vsub.f32 1.0, %v460
      %v462 = vmul.f32 %v459, %v461
      %v463 = vadd.f32 %v459, %v462
      %vm464 = vweird.f32 %v247
      %vm465 = vweird.f32 %v459
      %vm466 = vmor %vm464, %vm465
      %v467 = vsel %vm466, %v459, %v463
      %v468 = vand.u32 2147483647, %v247
      %vm469 = vcmp.eq.f32.partialorder %v468, 8.507059e+37
      %v470 = vand.u32 %v247, 2147483648
      %v471 = vor.u32 1.1754944e-38, %v470
      %v472 = vsel %vm469, %v471, %v467
      %v473 = vmul.f32 1.0, %v472
      %v474 = vrcp.pop %v248
      %v475 = vmul.f32 %v248, %v474
      %v476 = vsub.f32 1.0, %v475
      %v477 = vmul.f32 %v474, %v476
      %v478 = vadd.f32 %v474, %v477
      %vm479 = vweird.f32 %v248
      %vm480 = vweird.f32 %v474
      %vm481 = vmor %vm479, %vm480
      %v482 = vsel %vm481, %v474, %v478
      %v483 = vand.u32 2147483647, %v248
      %vm484 = vcmp.eq.f32.partialorder %v483, 8.507059e+37
      %v485 = vand.u32 %v248, 2147483648
      %v486 = vor.u32 1.1754944e-38, %v485
      %v487 = vsel %vm484, %v486, %v482
      %v488 = vmul.f32 1.0, %v487
      %v489 = vmul.f32 %v146, %v263
      %v490 = vmul.f32 %v148, %v278
      %v491 = vmul.f32 %v151, %v293
      %v492 = vmul.f32 %v153, %v308
      %v493 = vmul.f32 %v156, %v323
      %v494 = vmul.f32 %v158, %v338
      %v495 = vmul.f32 %v161, %v353
      %v496 = vmul.f32 %v163, %v368
      %v497 = vmul.f32 %v166, %v383
      %v498 = vmul.f32 %v168, %v398
      %v499 = vmul.f32 %v171, %v413
      %v500 = vmul.f32 %v173, %v428
      %v501 = vmul.f32 %v176, %v443
      %v502 = vmul.f32 %v178, %v458
      %v503 = vmul.f32 %v181, %v473
      %v504 = vmul.f32 %v183, %v488
      %v505 = vld [vmem:[%s6] sm:$0x1]
      %v507 = vperm.slane %v505, 0
      %v509 = vmul.f32 %v489, %v507
      %v510 = vmul.f32 %v490, %v507
      %v511 = vmul.f32 %v491, %v507
      %v512 = vmul.f32 %v492, %v507
      %v513 = vmul.f32 %v493, %v507
      %v514 = vmul.f32 %v494, %v507
      %v515 = vmul.f32 %v495, %v507
      %v516 = vmul.f32 %v496, %v507
      %v517 = vmul.f32 %v497, %v507
      %v518 = vmul.f32 %v498, %v507
      %v519 = vmul.f32 %v499, %v507
      %v520 = vmul.f32 %v500, %v507
      %v521 = vmul.f32 %v501, %v507
      %v522 = vmul.f32 %v502, %v507
      %v523 = vmul.f32 %v503, %v507
      %v524 = vmul.f32 %v504, %v507
      %v525 = vsel %vm111, %v509, 0.0
      %526 = vadd.xlane.f32.xlu0 %v525
      %v527 = vpop.xlane.xlu0 %526
      %v528 = vsel %vm111, %v510, 0.0
      %529 = vadd.xlane.f32.xlu0 %v528
      %v530 = vpop.xlane.xlu0 %529
      %v531 = vsel %vm111, %v511, 0.0
      %532 = vadd.xlane.f32.xlu0 %v531
      %v533 = vpop.xlane.xlu0 %532
      %v534 = vsel %vm111, %v512, 0.0
      %535 = vadd.xlane.f32.xlu0 %v534
      %v536 = vpop.xlane.xlu0 %535
      %v537 = vsel %vm111, %v513, 0.0
      %538 = vadd.xlane.f32.xlu0 %v537
      %v539 = vpop.xlane.xlu0 %538
      %v540 = vsel %vm111, %v514, 0.0
      %541 = vadd.xlane.f32.xlu0 %v540
      %v542 = vpop.xlane.xlu0 %541
      %v543 = vsel %vm111, %v515, 0.0
      %544 = vadd.xlane.f32.xlu0 %v543
      %v545 = vpop.xlane.xlu0 %544
      %v546 = vsel %vm111, %v516, 0.0
      %547 = vadd.xlane.f32.xlu0 %v546
      %v548 = vpop.xlane.xlu0 %547
      %v549 = vsel %vm111, %v517, 0.0
      %550 = vadd.xlane.f32.xlu0 %v549
      %v551 = vpop.xlane.xlu0 %550
      %v552 = vsel %vm111, %v518, 0.0
      %553 = vadd.xlane.f32.xlu0 %v552
      %v554 = vpop.xlane.xlu0 %553
      %v555 = vsel %vm111, %v519, 0.0
      %556 = vadd.xlane.f32.xlu0 %v555
      %v557 = vpop.xlane.xlu0 %556
      %v558 = vsel %vm111, %v520, 0.0
      %559 = vadd.xlane.f32.xlu0 %v558
      %v560 = vpop.xlane.xlu0 %559
      %v561 = vsel %vm111, %v521, 0.0
      %562 = vadd.xlane.f32.xlu0 %v561
      %v563 = vpop.xlane.xlu0 %562
      %v564 = vsel %vm111, %v522, 0.0
      %565 = vadd.xlane.f32.xlu0 %v564
      %v566 = vpop.xlane.xlu0 %565
      %v567 = vsel %vm111, %v523, 0.0
      %568 = vadd.xlane.f32.xlu0 %v567
      %v569 = vpop.xlane.xlu0 %568
      %v570 = vsel %vm111, %v524, 0.0
      %571 = vadd.xlane.f32.xlu0 %v570
      %v572 = vpop.xlane.xlu0 %571
      %v573 = vld [vmem:[%s4] sm:$0xff]
      %v574 = vld [vmem:[%s4 + $0x8] sm:$0xff]
      %v575 = vld [vmem:[%s4 + $0x10] sm:$0xff]
      %v576 = vld [vmem:[%s4 + $0x18] sm:$0xff]
      %v577 = vld [vmem:[%s4 + $0x20] sm:$0xff]
      %v578 = vld [vmem:[%s4 + $0x28] sm:$0xff]
      %v579 = vld [vmem:[%s4 + $0x30] sm:$0xff]
      %v580 = vld [vmem:[%s4 + $0x38] sm:$0xff]
      %v581 = vld [vmem:[%s4 + $0x40] sm:$0xff]
      %v582 = vld [vmem:[%s4 + $0x48] sm:$0xff]
      %v583 = vld [vmem:[%s4 + $0x50] sm:$0xff]
      %v584 = vld [vmem:[%s4 + $0x58] sm:$0xff]
      %v585 = vld [vmem:[%s4 + $0x60] sm:$0xff]
      %v586 = vld [vmem:[%s4 + $0x68] sm:$0xff]
      %v587 = vld [vmem:[%s4 + $0x70] sm:$0xff]
      %v588 = vld [vmem:[%s4 + $0x78] sm:$0xff]
      %v589 = vmul.f32 %v527, %v573
      %v590 = vmul.f32 %v530, %v574
      %v591 = vmul.f32 %v533, %v575
      %v592 = vmul.f32 %v536, %v576
      %v593 = vmul.f32 %v539, %v577
      %v594 = vmul.f32 %v542, %v578
      %v595 = vmul.f32 %v545, %v579
      %v596 = vmul.f32 %v548, %v580
      %v597 = vmul.f32 %v551, %v581
      %v598 = vmul.f32 %v554, %v582
      %v599 = vmul.f32 %v557, %v583
      %v600 = vmul.f32 %v560, %v584
      %v601 = vmul.f32 %v563, %v585
      %v602 = vmul.f32 %v566, %v586
      %v603 = vmul.f32 %v569, %v587
      %v604 = vmul.f32 %v572, %v588
      %v605 = vpack.c.bf16 %v590, %v589
      %v606 = vpack.c.bf16 %v592, %v591
      %v607 = vpack.c.bf16 %v594, %v593
      %v608 = vpack.c.bf16 %v596, %v595
      %v609 = vpack.c.bf16 %v598, %v597
      %v610 = vpack.c.bf16 %v600, %v599
      %v611 = vpack.c.bf16 %v602, %v601
      %v612 = vpack.c.bf16 %v604, %v603
      %v613 = vlaneseq
      %v614 = vand.u32 %v613, 127
      %v615 = vld [vmem:[%s2] sm:$0xff]
      %v616 = vld [vmem:[%s2 + $0x8] sm:$0xff]
      %v617 = vld [vmem:[%s2 + $0x10] sm:$0xff]
      %v618 = vld [vmem:[%s2 + $0x18] sm:$0xff]
      %v619 = vld [vmem:[%s2 + $0x20] sm:$0xff]
      %v620 = vld [vmem:[%s2 + $0x28] sm:$0xff]
      %v621 = vld [vmem:[%s2 + $0x30] sm:$0xff]
      %v622 = vld [vmem:[%s2 + $0x38] sm:$0xff]
      %v623 = vld [vmem:[%s2 + $0x40] sm:$0xff]
      %v624 = vld [vmem:[%s2 + $0x48] sm:$0xff]
      %v625 = vld [vmem:[%s2 + $0x50] sm:$0xff]
      %v626 = vld [vmem:[%s2 + $0x58] sm:$0xff]
      %v627 = vld [vmem:[%s2 + $0x60] sm:$0xff]
      %v628 = vld [vmem:[%s2 + $0x68] sm:$0xff]
      %v629 = vld [vmem:[%s2 + $0x70] sm:$0xff]
      %v630 = vld [vmem:[%s2 + $0x78] sm:$0xff]
      %s631 = smul.u32 0, 128
      %v632 = vstv %s631
      %v633 = vsub.s32 %v615, %v632
      %v634 = vsub.s32 %v616, %v632
      %v635 = vsub.s32 %v617, %v632
      %v636 = vsub.s32 %v618, %v632
      %v637 = vsub.s32 %v619, %v632
      %v638 = vsub.s32 %v620, %v632
      %v639 = vsub.s32 %v621, %v632
      %v640 = vsub.s32 %v622, %v632
      %v641 = vsub.s32 %v623, %v632
      %v642 = vsub.s32 %v624, %v632
      %v643 = vsub.s32 %v625, %v632
      %v644 = vsub.s32 %v626, %v632
      %v645 = vsub.s32 %v627, %v632
      %v646 = vsub.s32 %v628, %v632
      %v647 = vsub.s32 %v629, %v632
      %v648 = vsub.s32 %v630, %v632
      %649 = vset.pattern.permute.xlu0 0
      %650 = vperm.xlu0 %649, %v633
      %v651 = vpop.permute.xlu0 %650
      %652 = vset.pattern.permute.xlu0 0
      %653 = vperm.xlu0 %652, %v634
      %v654 = vpop.permute.xlu0 %653
      %655 = vset.pattern.permute.xlu0 0
      %656 = vperm.xlu0 %655, %v635
      %v657 = vpop.permute.xlu0 %656
      %658 = vset.pattern.permute.xlu0 0
      %659 = vperm.xlu0 %658, %v636
      %v660 = vpop.permute.xlu0 %659
      %661 = vset.pattern.permute.xlu0 0
      %662 = vperm.xlu0 %661, %v637
      %v663 = vpop.permute.xlu0 %662
      %664 = vset.pattern.permute.xlu0 0
      %665 = vperm.xlu0 %664, %v638
      %v666 = vpop.permute.xlu0 %665
      %667 = vset.pattern.permute.xlu0 0
      %668 = vperm.xlu0 %667, %v639
      %v669 = vpop.permute.xlu0 %668
      %670 = vset.pattern.permute.xlu0 0
      %671 = vperm.xlu0 %670, %v640
      %v672 = vpop.permute.xlu0 %671
      %673 = vset.pattern.permute.xlu0 0
      %674 = vperm.xlu0 %673, %v641
      %v675 = vpop.permute.xlu0 %674
      %676 = vset.pattern.permute.xlu0 0
      %677 = vperm.xlu0 %676, %v642
      %v678 = vpop.permute.xlu0 %677
      %679 = vset.pattern.permute.xlu0 0
      %680 = vperm.xlu0 %679, %v643
      %v681 = vpop.permute.xlu0 %680
      %682 = vset.pattern.permute.xlu0 0
      %683 = vperm.xlu0 %682, %v644
      %v684 = vpop.permute.xlu0 %683
      %685 = vset.pattern.permute.xlu0 0
      %686 = vperm.xlu0 %685, %v645
      %v687 = vpop.permute.xlu0 %686
      %688 = vset.pattern.permute.xlu0 0
      %689 = vperm.xlu0 %688, %v646
      %v690 = vpop.permute.xlu0 %689
      %691 = vset.pattern.permute.xlu0 0
      %692 = vperm.xlu0 %691, %v647
      %v693 = vpop.permute.xlu0 %692
      %694 = vset.pattern.permute.xlu0 0
      %695 = vperm.xlu0 %694, %v648
      %v696 = vpop.permute.xlu0 %695
      %vm697 = vcmp.eq.s32.totalorder %v651, %v614
      %vm698 = vcmp.eq.s32.totalorder %v654, %v614
      %vm699 = vcmp.eq.s32.totalorder %v657, %v614
      %vm700 = vcmp.eq.s32.totalorder %v660, %v614
      %vm701 = vcmp.eq.s32.totalorder %v663, %v614
      %vm702 = vcmp.eq.s32.totalorder %v666, %v614
      %vm703 = vcmp.eq.s32.totalorder %v669, %v614
      %vm704 = vcmp.eq.s32.totalorder %v672, %v614
      %vm705 = vcmp.eq.s32.totalorder %v675, %v614
      %vm706 = vcmp.eq.s32.totalorder %v678, %v614
      %vm707 = vcmp.eq.s32.totalorder %v681, %v614
      %vm708 = vcmp.eq.s32.totalorder %v684, %v614
      %vm709 = vcmp.eq.s32.totalorder %v687, %v614
      %vm710 = vcmp.eq.s32.totalorder %v690, %v614
      %vm711 = vcmp.eq.s32.totalorder %v693, %v614
      %vm712 = vcmp.eq.s32.totalorder %v696, %v614
      %v713 = vsel %vm697, 1, 0
      %v714 = vsel %vm698, 1, 0
      %v715 = vsel %vm699, 1, 0
      %v716 = vsel %vm700, 1, 0
      %v717 = vsel %vm701, 1, 0
      %v718 = vsel %vm702, 1, 0
      %v719 = vsel %vm703, 1, 0
      %v720 = vsel %vm704, 1, 0
      %v721 = vsel %vm705, 1, 0
      %v722 = vsel %vm706, 1, 0
      %v723 = vsel %vm707, 1, 0
      %v724 = vsel %vm708, 1, 0
      %v725 = vsel %vm709, 1, 0
      %v726 = vsel %vm710, 1, 0
      %v727 = vsel %vm711, 1, 0
      %v728 = vsel %vm712, 1, 0
      %v729 = vcvt.s32.f32 %v713
      %v730 = vcvt.s32.f32 %v714
      %v731 = vcvt.s32.f32 %v715
      %v732 = vcvt.s32.f32 %v716
      %v733 = vcvt.s32.f32 %v717
      %v734 = vcvt.s32.f32 %v718
      %v735 = vcvt.s32.f32 %v719
      %v736 = vcvt.s32.f32 %v720
      %v737 = vcvt.s32.f32 %v721
      %v738 = vcvt.s32.f32 %v722
      %v739 = vcvt.s32.f32 %v723
      %v740 = vcvt.s32.f32 %v724
      %v741 = vcvt.s32.f32 %v725
      %v742 = vcvt.s32.f32 %v726
      %v743 = vcvt.s32.f32 %v727
      %v744 = vcvt.s32.f32 %v728
      %v745 = vpack.c.bf16 %v730, %v729
      %v746 = vpack.c.bf16 %v732, %v731
      %v747 = vpack.c.bf16 %v734, %v733
      %v748 = vpack.c.bf16 %v736, %v735
      %v749 = vpack.c.bf16 %v738, %v737
      %v750 = vpack.c.bf16 %v740, %v739
      %v751 = vpack.c.bf16 %v742, %v741
      %v752 = vpack.c.bf16 %v744, %v743
      %753 = vxpose.xlu0.c.b16.start [1/8] %v605, 128
      %754 = vxpose.xlu0.c.b16.cont [2/8] %v606, 128
      %755 = vxpose.xlu0.c.b16.cont [3/8] %v607, 128
      %756 = vxpose.xlu0.c.b16.cont [4/8] %v608, 128
      %757 = vxpose.xlu0.c.b16.cont [5/8] %v609, 128
      %758 = vxpose.xlu0.c.b16.cont [6/8] %v610, 128
      %759 = vxpose.xlu0.c.b16.cont [7/8] %v611, 128
      %760 = vxpose.xlu0.c.b16.end [8/8] %v612, 128
      %v761 = vpop.trf.xlu0
      %v762 = vpop.trf.xlu0
      %v763 = vpop.trf.xlu0
      %v764 = vpop.trf.xlu0
      %v765 = vpop.trf.xlu0
      %v766 = vpop.trf.xlu0
      %v767 = vpop.trf.xlu0
      %v768 = vpop.trf.xlu0
      %769 = vmatpush.bf16.msra.mxu0 %v752
      %770 = vmatpush.bf16.msra.mxu0 %v751
      %771 = vmatpush.bf16.msra.mxu0 %v750
      %772 = vmatpush.bf16.msra.mxu0 %v749
      %773 = vmatpush.bf16.msra.mxu0 %v748
      %774 = vmatpush.bf16.msra.mxu0 %v747
      %775 = vmatpush.bf16.msra.mxu0 %v746
      %776 = vmatpush.bf16.msra.mxu0 %v745
      %777 = vmatmul.bf16.gmra.mxu0 %v761
      %v778 = vpop.f32.mrf.mxu0
      %v779 = vadd.f32 0.0, %v778
      %v780 = vpop.f32.mrf.mxu0
      %781 = vdwg.mxu0
      %v782 = vld [vmem:[#allocation5] sm:$0xff]
      %v783 = vadd.f32 %v782, %v779
      %784 = vst [vmem:[#allocation5] sm:$0xff] %v783
    $region29: #{tpu_custom_call.1} parent=1 // pred_fallthru
      _
    // Predicated region
    $region30: #{tpu_custom_call.1} parent=1 // pred_check
      _
    $region31: #{tpu_custom_call.1} parent=1 // pred_check_branch
      %786 = sbr.rel (0) target = $region33
    $region32: #{tpu_custom_call.1} parent=1 // pred_region
      %788 = vsyncadd [#allocation6], 0
      %s790 = sshll.u32 [#allocation5], 4
      %s791 = int_to_ptr.vmem [resolvable:$true] %s790
      %s792 = sshll.u32 %s7, 4
      %s793 = int_to_ptr.hbm [resolvable:$true] %s792
      %795 = dma.vmem_to_hbm [thread:$0]  %s791, 128, %s793, [#allocation6]
    $region33: #{tpu_custom_call.1} parent=1 // pred_fallthru
      _
    // Predicated region
    $region34: #{tpu_custom_call.1} parent=1 // pred_check
      _
    $region35: #{tpu_custom_call.1} parent=1 // pred_check_branch
      %797 = sbr.rel (0) target = $region37
    $region36: #{tpu_custom_call.1} parent=1 // pred_region
      %799 = dma.done [#allocation6], 128
    $region37: #{tpu_custom_call.1} parent=1 // pred_fallthru
      _
    %800 = vsyncpa [#allocation6], 1

</llo_original>
